<compile_context>
chip_gen: v6e
topology: v6e:2x2x1
jax: 0.10.0
libtpu: 0.0.40
codegen_flags: <defaults>
</compile_context>

<pallas_src>
import jax
import jax.numpy as jnp
from jax import lax
from jax.experimental import pallas as pl
from jax.experimental.pallas import tpu as pltpu


def _silu(x):
    return x * (1.0 / (1.0 + jnp.exp(-x)))


def _softplus(x):
    # matches torch.nn.functional.softplus (beta=1, threshold=20)
    return jnp.where(x > 20.0, x, jnp.log1p(jnp.exp(jnp.minimum(x, 20.0))))


def mamba_block_kernel(
    x_ref,                 # (TB, L, D)  f32
    rmsw_ref,              # (1, D)      f32
    w_in_ref, b_in_ref,    # (D, 4*D2) bf16, (1, 4*D2) f32  [inp | inp<<1 | inp>>1 | D]
    convw_ref, convb_ref,  # (3, TB*L, 1) f32, (TB*L, 1) f32
    clW_ref, clb_ref,      # (D2, D2) bf16, (1, D2) f32
    wU_ref, bU_ref,        # (D2, D2+2N) bf16, (1, D2+2N) f32  [fc1 | fc2 | fc3]
    outW_ref, outb_ref,    # (D2, D) bf16, (1, D) f32
    o_ref,                 # (TB, L, D)
):
    TB, L, D = x_ref.shape
    M = TB * L
    D2 = clW_ref.shape[0]
    N = (wU_ref.shape[1] - D2) // 2

    # Fold the batch block into the matmul M dimension.
    x = x_ref[...].reshape(M, D)

    # ---- RMSNorm ----
    ms = jnp.mean(x * x, axis=-1, keepdims=True)
    xn = x * lax.rsqrt(ms + 1e-5) * rmsw_ref[...]

    # ---- one bf16 MXU pass: inp_proj, its +/-1 feature-shifted copies (the
    # depthwise conv's neighbour taps, folded into the weights), and D(x) ----
    proj = jnp.dot(xn.astype(jnp.bfloat16), w_in_ref[...],
                   preferred_element_type=jnp.float32) + b_in_ref[...]   # (M, 4*D2)
    xp       = proj[:, 0 * D2:1 * D2]   # inp_proj(xn)
    xp_left  = proj[:, 1 * D2:2 * D2]   # column j holds xp[:, j-1]  (zero at j=0)
    xp_right = proj[:, 2 * D2:3 * D2]   # column j holds xp[:, j+1]  (zero at j=D2-1)
    x_res    = proj[:, 3 * D2:4 * D2]   # D(xn), pre-silu

    # ---- depthwise conv (k=3, zero pad=1) along feature axis, per-L taps ----
    xc = (convw_ref[0] * xp_left + convw_ref[1] * xp + convw_ref[2] * xp_right
          + convb_ref[...])
    xc = _silu(xc)

    # ---- conv_linear ----
    u = jnp.dot(xc.astype(jnp.bfloat16), clW_ref[...],
                preferred_element_type=jnp.float32) + clb_ref[...]       # (M, D2)

    # ---- S6 with fused fc1/fc2/fc3 (h starts at zero -> y = u*delta*sum_n(C*B)) ----
    z = jnp.dot(u.astype(jnp.bfloat16), wU_ref[...],
                preferred_element_type=jnp.float32) + bU_ref[...]        # (M, D2+2N)
    delta = _softplus(z[:, :D2])
    Bm = z[:, D2:D2 + N]
    Cm = z[:, D2 + N:]
    cb = jnp.sum(Cm * Bm, axis=-1, keepdims=True)                        # (M, 1)
    y_ssm = u * delta * cb                                               # (M, D2)

    # ---- gating + out_proj ----
    comb = _silu(y_ssm) * _silu(x_res)
    out = jnp.dot(comb.astype(jnp.bfloat16), outW_ref[...],
                  preferred_element_type=jnp.float32) + outb_ref[...]    # (M, D)
    o_ref[...] = out.reshape(TB, L, D).astype(o_ref.dtype)


def _pick_block_b(batch, seq_len, target_rows=256):
    """Largest batch block TB with TB*L <= target_rows, preferring >=2 grid steps."""
    divs = [tb for tb in range(1, batch + 1) if batch % tb == 0]
    fits = [tb for tb in divs if tb * seq_len <= target_rows] or [1]
    multi = [tb for tb in fits if batch // tb >= 2]
    return max(multi if multi else fits)


def mamba_block(x, params, *, block_b=None):
    B, L, D = x.shape
    D2 = 2 * D
    N = params["fc2_W"].shape[1]
    TB = _pick_block_b(B, L) if block_b is None else block_b
    assert B % TB == 0

    wdt = jnp.bfloat16
    f32 = jnp.float32

    # ---- fold the conv's +/-1 neighbour taps into the inp_proj weights ----
    W_inp, b_inp = params["inp_W"], params["inp_b"]            # (D, D2), (1, D2)
    zW = jnp.zeros((D, 1), f32)
    zb = jnp.zeros((1, 1), f32)
    W_left = jnp.concatenate([zW, W_inp[:, :-1]], axis=1)      # col j -> xp[:, j-1]
    b_left = jnp.concatenate([zb, b_inp[:, :-1]], axis=1)
    W_right = jnp.concatenate([W_inp[:, 1:], zW], axis=1)      # col j -> xp[:, j+1]
    b_right = jnp.concatenate([b_inp[:, 1:], zb], axis=1)

    w_in = jnp.concatenate([W_inp, W_left, W_right, params["D_W"]],
                           axis=1).astype(wdt)                 # (D, 4*D2)
    b_in = jnp.concatenate([b_inp, b_left, b_right, params["D_b"]], axis=1)

    w_u = jnp.concatenate([params["fc1_W"], params["fc2_W"], params["fc3_W"]],
                          axis=1).astype(wdt)                  # (D2, D2+2N)
    b_u = jnp.concatenate([params["fc1_b"], params["fc2_b"], params["fc3_b"]], axis=1)
    cl_W = params["cl_W"].astype(wdt)
    out_W = params["out_W"].astype(wdt)
    # Tile conv taps over the batch block so they broadcast over (TB*L, D2) rows.
    conv_w = jnp.tile(params["conv_w"], (1, TB, 1))            # (3, TB*L, 1)
    conv_b = jnp.tile(params["conv_b"], (TB, 1))               # (TB*L, 1)

    weight_args = [
        params["rms_w"],
        w_in, b_in,
        conv_w, conv_b,
        cl_W, params["cl_b"],
        w_u, b_u,
        out_W, params["out_b"],
    ]

    def full_spec(a):
        return pl.BlockSpec(a.shape, lambda i, nd=a.ndim: (0,) * nd)

    in_specs = [pl.BlockSpec((TB, L, D), lambda i: (i, 0, 0))]
    in_specs += [full_spec(a) for a in weight_args]

    flops = 2 * B * L * (D * 4 * D2           # fused inp/left/right/D projection
                         + D2 * D2            # conv_linear
                         + D2 * (D2 + 2 * N)  # fused fc1/fc2/fc3
                         + D2 * D)            # out_proj
    transcendentals = B * L * 4 * D2          # exp in 3x silu + softplus
    bytes_accessed = (x.size + B * L * D) * 4 + sum(
        int(a.size) * a.dtype.itemsize for a in weight_args)

    return pl.pallas_call(
        mamba_block_kernel,
        out_shape=jax.ShapeDtypeStruct((B, L, D), x.dtype),
        grid=(B // TB,),
        in_specs=in_specs,
        out_specs=pl.BlockSpec((TB, L, D), lambda i: (i, 0, 0)),
        compiler_params=pltpu.CompilerParams(
            dimension_semantics=("parallel",),
            # Resident fused weights + double-buffered activation blocks.
            vmem_limit_bytes=64 * 1024 * 1024,
        ),
        cost_estimate=pl.CostEstimate(
            flops=int(flops),
            transcendentals=int(transcendentals),
            bytes_accessed=int(bytes_accessed),
        ),
    )(x, *weight_args)


def mamba_block_ref(x, params):
    """Pure-JAX f32 reference mirroring the PyTorch forward."""
    def silu(v):
        return v * jax.nn.sigmoid(v)

    xn = x * lax.rsqrt(jnp.mean(x * x, -1, keepdims=True) + 1e-5) * params["rms_w"][0]
    xp = xn @ params["inp_W"] + params["inp_b"]                    # (B, L, 2D)
    w = params["conv_w"][:, :, 0]                                  # (3, L)
    left = jnp.pad(xp, ((0, 0), (0, 0), (1, 0)))[:, :, :-1]        # xp[..., j-1]
    right = jnp.pad(xp, ((0, 0), (0, 0), (0, 1)))[:, :, 1:]        # xp[..., j+1]
    xc = (w[0][None, :, None] * left + w[1][None, :, None] * xp
          + w[2][None, :, None] * right + params["conv_b"][None, :, :])
    xc = silu(xc)
    u = xc @ params["cl_W"] + params["cl_b"]
    delta = jax.nn.softplus(u @ params["fc1_W"] + params["fc1_b"])
    Bm = u @ params["fc2_W"] + params["fc2_b"]
    Cm = u @ params["fc3_W"] + params["fc3_b"]
    y = u * delta * jnp.sum(Cm * Bm, -1, keepdims=True)
    res = silu(xn @ params["D_W"] + params["D_b"])
    comb = silu(y) * res
    return comb @ params["out_W"] + params["out_b"]


def make_params(key, seq_len, d_model, state_size):
    d2 = 2 * d_model
    ks = jax.random.split(key, 16)

    def lin(k, fan_in, shape):
        bound = 1.0 / (fan_in ** 0.5)
        return jax.random.uniform(k, shape, jnp.float32, -bound, bound)

    params = {
        "rms_w": jnp.ones((1, d_model), jnp.float32),
        # inp_proj: Linear(d_model -> 2*d_model)
        "inp_W": lin(ks[0], d_model, (d_model, d2)),
        "inp_b": lin(ks[1], d_model, (1, d2)),
        # depthwise conv: torch weight (seq_len, 1, 3) stored as (3, seq_len, 1); bias (seq_len,) as (seq_len, 1)
        "conv_w": lin(ks[2], 3, (3, seq_len, 1)),
        "conv_b": lin(ks[3], 3, (seq_len, 1)),
        # conv_linear: Linear(2d -> 2d)
        "cl_W": lin(ks[4], d2, (d2, d2)),
        "cl_b": lin(ks[5], d2, (1, d2)),
        # S6 fc1/fc2/fc3 (on 2d features)
        "fc1_W": lin(ks[6], d2, (d2, d2)),
        "fc1_b": lin(ks[7], d2, (1, d2)),
        "fc2_W": lin(ks[8], d2, (d2, state_size)),
        "fc2_b": lin(ks[9], d2, (1, state_size)),
        "fc3_W": lin(ks[10], d2, (d2, state_size)),
        "fc3_b": lin(ks[11], d2, (1, state_size)),
        # D: Linear(d_model -> 2*d_model)
        "D_W": lin(ks[12], d_model, (d_model, d2)),
        "D_b": lin(ks[13], d_model, (1, d2)),
        # out_proj: Linear(2d -> d), bias init constant 1.0
        "out_W": lin(ks[14], d2, (d2, d_model)),
        "out_b": jnp.ones((1, d_model), jnp.float32),
    }
    # TODO(synk): S6.A is initialized in the reference but never affects the forward
    # output (h starts at zero, so dA multiplies zero); it is omitted here.
    return params


if __name__ == "__main__":
    B, L, D, N = 2, 8, 32, 16   # batch, seq_len, d_model, state_size
    key = jax.random.PRNGKey(0)
    kx, kp = jax.random.split(key)
    x = jax.random.normal(kx, (B, L, D), jnp.float32)
    params = make_params(kp, L, D, N)

    out = mamba_block(x, params)
    jax.block_until_ready(out)
    assert out.shape == (B, L, D)
    assert bool(jnp.all(jnp.isfinite(out)))

    ref = mamba_block_ref(x, params)
    err = float(jnp.max(jnp.abs(out - ref)))
    assert err < 2e-2, f"max abs error vs reference: {err}"
    print("KERNEL_OK")
</pallas_src>

<mosaic_0001>
module attributes {stable_mosaic.version = 11 : i64} {
  func.func @mamba_block_kernel(%arg0: i32, %arg1: memref<1x8x32xf32, #tpu.memory_space<vmem>>, %arg2: memref<1x32xf32, #tpu.memory_space<vmem>>, %arg3: memref<32x256xbf16, #tpu.memory_space<vmem>>, %arg4: memref<1x256xf32, #tpu.memory_space<vmem>>, %arg5: memref<3x8x1xf32, #tpu.memory_space<vmem>>, %arg6: memref<8x1xf32, #tpu.memory_space<vmem>>, %arg7: memref<64x64xbf16, #tpu.memory_space<vmem>>, %arg8: memref<1x64xf32, #tpu.memory_space<vmem>>, %arg9: memref<64x96xbf16, #tpu.memory_space<vmem>>, %arg10: memref<1x96xf32, #tpu.memory_space<vmem>>, %arg11: memref<64x32xbf16, #tpu.memory_space<vmem>>, %arg12: memref<1x32xf32, #tpu.memory_space<vmem>>, %arg13: memref<1x8x32xf32, #tpu.memory_space<vmem>>) attributes {dimension_semantics = [#tpu.dimension_semantics<parallel>], iteration_bounds = array<i64: 2>, scalar_prefetch = 0 : i64, scratch_operands = 0 : i64, tpu.core_type = #tpu.core_type<tc>, window_params = [{transform_indices = @transform_0, window_bounds = array<i64: 1, 8, 32>}, {pipeline_mode = #tpu.pipeline_mode<synchronous>, transform_indices = @transform_1, window_bounds = array<i64: 1, 32>}, {pipeline_mode = #tpu.pipeline_mode<synchronous>, transform_indices = @transform_2, window_bounds = array<i64: 32, 256>}, {pipeline_mode = #tpu.pipeline_mode<synchronous>, transform_indices = @transform_3, window_bounds = array<i64: 1, 256>}, {pipeline_mode = #tpu.pipeline_mode<synchronous>, transform_indices = @transform_4, window_bounds = array<i64: 3, 8, 1>}, {pipeline_mode = #tpu.pipeline_mode<synchronous>, transform_indices = @transform_5, window_bounds = array<i64: 8, 1>}, {pipeline_mode = #tpu.pipeline_mode<synchronous>, transform_indices = @transform_6, window_bounds = array<i64: 64, 64>}, {pipeline_mode = #tpu.pipeline_mode<synchronous>, transform_indices = @transform_7, window_bounds = array<i64: 1, 64>}, {pipeline_mode = #tpu.pipeline_mode<synchronous>, transform_indices = @transform_8, window_bounds = array<i64: 64, 96>}, {pipeline_mode = #tpu.pipeline_mode<synchronous>, transform_indices = @transform_9, window_bounds = array<i64: 1, 96>}, {pipeline_mode = #tpu.pipeline_mode<synchronous>, transform_indices = @transform_10, window_bounds = array<i64: 64, 32>}, {pipeline_mode = #tpu.pipeline_mode<synchronous>, transform_indices = @transform_11, window_bounds = array<i64: 1, 32>}, {transform_indices = @transform_12, window_bounds = array<i64: 1, 8, 32>}]} {
    %c0 = arith.constant 0 : index
    %c0_0 = arith.constant 0 : index
    %c0_1 = arith.constant 0 : index
    %0 = vector.load %arg1[%c0, %c0_0, %c0_1] : memref<1x8x32xf32, #tpu.memory_space<vmem>>, vector<1x8x32xf32>
    %1 = vector.shape_cast %0 : vector<1x8x32xf32> to vector<8x32xf32>
    %2 = arith.mulf %1, %1 : vector<8x32xf32>
    %cst = arith.constant dense<0.000000e+00> : vector<8xf32>
    %3 = vector.multi_reduction <add>, %2, %cst [1] : vector<8x32xf32> to vector<8xf32>
    %4 = vector.shape_cast %3 : vector<8xf32> to vector<8x1xf32>
    %cst_2 = arith.constant 3.200000e+01 : f32
    %5 = vector.broadcast %cst_2 : f32 to vector<8x1xf32>
    %6 = arith.divf %4, %5 : vector<8x1xf32>
    %cst_3 = arith.constant 9.99999974E-6 : f32
    %7 = vector.broadcast %cst_3 : f32 to vector<8x1xf32>
    %8 = arith.addf %6, %7 : vector<8x1xf32>
    %9 = math.rsqrt %8 : vector<8x1xf32>
    %10 = vector.broadcast %9 : vector<8x1xf32> to vector<8x32xf32>
    %11 = arith.mulf %1, %10 : vector<8x32xf32>
    %c0_4 = arith.constant 0 : index
    %c0_5 = arith.constant 0 : index
    %12 = vector.load %arg2[%c0_4, %c0_5] : memref<1x32xf32, #tpu.memory_space<vmem>>, vector<1x32xf32>
    %13 = vector.broadcast %12 : vector<1x32xf32> to vector<8x32xf32>
    %14 = arith.mulf %11, %13 : vector<8x32xf32>
    %15 = arith.truncf %14 : vector<8x32xf32> to vector<8x32xbf16>
    %c0_6 = arith.constant 0 : index
    %c0_7 = arith.constant 0 : index
    %16 = vector.load %arg3[%c0_6, %c0_7] : memref<32x256xbf16, #tpu.memory_space<vmem>>, vector<32x256xbf16>
    %cst_8 = arith.constant dense<0.000000e+00> : vector<8x256xf32>
    %17 = tpu.matmul %15, %16, %cst_8 {dimension_numbers = #tpu.dot_dimension_numbers<[1], [0], [0], [1], [0, 0, 1, 1], [], []>} : vector<8x32xbf16>, vector<32x256xbf16>, vector<8x256xf32> -> vector<8x256xf32>
    %c0_9 = arith.constant 0 : index
    %c0_10 = arith.constant 0 : index
    %18 = vector.load %arg4[%c0_9, %c0_10] : memref<1x256xf32, #tpu.memory_space<vmem>>, vector<1x256xf32>
    %19 = vector.broadcast %18 : vector<1x256xf32> to vector<8x256xf32>
    %20 = arith.addf %17, %19 : vector<8x256xf32>
    %21 = vector.extract_strided_slice %20 {offsets = [0, 0], sizes = [8, 64], strides = [1, 1]} : vector<8x256xf32> to vector<8x64xf32>
    %22 = vector.extract_strided_slice %20 {offsets = [0, 64], sizes = [8, 64], strides = [1, 1]} : vector<8x256xf32> to vector<8x64xf32>
    %23 = vector.extract_strided_slice %20 {offsets = [0, 128], sizes = [8, 64], strides = [1, 1]} : vector<8x256xf32> to vector<8x64xf32>
    %24 = vector.extract_strided_slice %20 {offsets = [0, 192], sizes = [8, 64], strides = [1, 1]} : vector<8x256xf32> to vector<8x64xf32>
    %c0_11 = arith.constant 0 : index
    %c0_12 = arith.constant 0 : index
    %c0_13 = arith.constant 0 : index
    %25 = vector.load %arg5[%c0_11, %c0_12, %c0_13] : memref<3x8x1xf32, #tpu.memory_space<vmem>>, vector<1x8x1xf32>
    %26 = vector.shape_cast %25 : vector<1x8x1xf32> to vector<8x1xf32>
    %27 = vector.broadcast %26 : vector<8x1xf32> to vector<8x64xf32>
    %28 = arith.mulf %27, %22 : vector<8x64xf32>
    %c1 = arith.constant 1 : index
    %c0_14 = arith.constant 0 : index
    %c0_15 = arith.constant 0 : index
    %29 = vector.load %arg5[%c1, %c0_14, %c0_15] : memref<3x8x1xf32, #tpu.memory_space<vmem>>, vector<1x8x1xf32>
    %30 = vector.shape_cast %29 : vector<1x8x1xf32> to vector<8x1xf32>
    %31 = vector.broadcast %30 : vector<8x1xf32> to vector<8x64xf32>
    %32 = arith.mulf %31, %21 : vector<8x64xf32>
    %33 = arith.addf %28, %32 : vector<8x64xf32>
    %c2 = arith.constant 2 : index
    %c0_16 = arith.constant 0 : index
    %c0_17 = arith.constant 0 : index
    %34 = vector.load %arg5[%c2, %c0_16, %c0_17] : memref<3x8x1xf32, #tpu.memory_space<vmem>>, vector<1x8x1xf32>
    %35 = vector.shape_cast %34 : vector<1x8x1xf32> to vector<8x1xf32>
    %36 = vector.broadcast %35 : vector<8x1xf32> to vector<8x64xf32>
    %37 = arith.mulf %36, %23 : vector<8x64xf32>
    %38 = arith.addf %33, %37 : vector<8x64xf32>
    %c0_18 = arith.constant 0 : index
    %c0_19 = arith.constant 0 : index
    %39 = vector.load %arg6[%c0_18, %c0_19] : memref<8x1xf32, #tpu.memory_space<vmem>>, vector<8x1xf32>
    %40 = vector.broadcast %39 : vector<8x1xf32> to vector<8x64xf32>
    %41 = arith.addf %38, %40 : vector<8x64xf32>
    %cst_20 = arith.constant 0.000000e+00 : f32
    %42 = vector.broadcast %cst_20 : f32 to vector<8x64xf32>
    %43 = arith.subf %42, %41 : vector<8x64xf32>
    %44 = math.exp %43 : vector<8x64xf32>
    %cst_21 = arith.constant 1.000000e+00 : f32
    %45 = vector.broadcast %cst_21 : f32 to vector<8x64xf32>
    %46 = arith.addf %45, %44 : vector<8x64xf32>
    %cst_22 = arith.constant 1.000000e+00 : f32
    %47 = vector.broadcast %cst_22 : f32 to vector<8x64xf32>
    %48 = arith.divf %47, %46 : vector<8x64xf32>
    %49 = arith.mulf %41, %48 : vector<8x64xf32>
    %50 = arith.truncf %49 : vector<8x64xf32> to vector<8x64xbf16>
    %c0_23 = arith.constant 0 : index
    %c0_24 = arith.constant 0 : index
    %51 = vector.load %arg7[%c0_23, %c0_24] : memref<64x64xbf16, #tpu.memory_space<vmem>>, vector<64x64xbf16>
    %cst_25 = arith.constant dense<0.000000e+00> : vector<8x64xf32>
    %52 = tpu.matmul %50, %51, %cst_25 {dimension_numbers = #tpu.dot_dimension_numbers<[1], [0], [0], [1], [0, 0, 1, 1], [], []>} : vector<8x64xbf16>, vector<64x64xbf16>, vector<8x64xf32> -> vector<8x64xf32>
    %c0_26 = arith.constant 0 : index
    %c0_27 = arith.constant 0 : index
    %53 = vector.load %arg8[%c0_26, %c0_27] : memref<1x64xf32, #tpu.memory_space<vmem>>, vector<1x64xf32>
    %54 = vector.broadcast %53 : vector<1x64xf32> to vector<8x64xf32>
    %55 = arith.addf %52, %54 : vector<8x64xf32>
    %56 = arith.truncf %55 : vector<8x64xf32> to vector<8x64xbf16>
    %c0_28 = arith.constant 0 : index
    %c0_29 = arith.constant 0 : index
    %57 = vector.load %arg9[%c0_28, %c0_29] : memref<64x96xbf16, #tpu.memory_space<vmem>>, vector<64x96xbf16>
    %cst_30 = arith.constant dense<0.000000e+00> : vector<8x96xf32>
    %58 = tpu.matmul %56, %57, %cst_30 {dimension_numbers = #tpu.dot_dimension_numbers<[1], [0], [0], [1], [0, 0, 1, 1], [], []>} : vector<8x64xbf16>, vector<64x96xbf16>, vector<8x96xf32> -> vector<8x96xf32>
    %c0_31 = arith.constant 0 : index
    %c0_32 = arith.constant 0 : index
    %59 = vector.load %arg10[%c0_31, %c0_32] : memref<1x96xf32, #tpu.memory_space<vmem>>, vector<1x96xf32>
    %60 = vector.broadcast %59 : vector<1x96xf32> to vector<8x96xf32>
    %61 = arith.addf %58, %60 : vector<8x96xf32>
    %62 = vector.extract_strided_slice %61 {offsets = [0, 0], sizes = [8, 64], strides = [1, 1]} : vector<8x96xf32> to vector<8x64xf32>
    %cst_33 = arith.constant 2.000000e+01 : f32
    %63 = vector.broadcast %cst_33 : f32 to vector<8x64xf32>
    %64 = arith.cmpf ogt, %62, %63 : vector<8x64xf32>
    %cst_34 = arith.constant 2.000000e+01 : f32
    %65 = vector.broadcast %cst_34 : f32 to vector<8x64xf32>
    %66 = arith.minimumf %62, %65 : vector<8x64xf32>
    %67 = math.exp %66 : vector<8x64xf32>
    %68 = math.log1p %67 : vector<8x64xf32>
    %69 = arith.select %64, %62, %68 : vector<8x64xi1>, vector<8x64xf32>
    %70 = vector.extract_strided_slice %61 {offsets = [0, 64], sizes = [8, 16], strides = [1, 1]} : vector<8x96xf32> to vector<8x16xf32>
    %71 = vector.extract_strided_slice %61 {offsets = [0, 80], sizes = [8, 16], strides = [1, 1]} : vector<8x96xf32> to vector<8x16xf32>
    %72 = arith.mulf %71, %70 : vector<8x16xf32>
    %cst_35 = arith.constant dense<0.000000e+00> : vector<8xf32>
    %73 = vector.multi_reduction <add>, %72, %cst_35 [1] : vector<8x16xf32> to vector<8xf32>
    %74 = vector.shape_cast %73 : vector<8xf32> to vector<8x1xf32>
    %75 = arith.mulf %55, %69 : vector<8x64xf32>
    %76 = vector.broadcast %74 : vector<8x1xf32> to vector<8x64xf32>
    %77 = arith.mulf %75, %76 : vector<8x64xf32>
    %cst_36 = arith.constant 0.000000e+00 : f32
    %78 = vector.broadcast %cst_36 : f32 to vector<8x64xf32>
    %79 = arith.subf %78, %77 : vector<8x64xf32>
    %80 = math.exp %79 : vector<8x64xf32>
    %cst_37 = arith.constant 1.000000e+00 : f32
    %81 = vector.broadcast %cst_37 : f32 to vector<8x64xf32>
    %82 = arith.addf %81, %80 : vector<8x64xf32>
    %cst_38 = arith.constant 1.000000e+00 : f32
    %83 = vector.broadcast %cst_38 : f32 to vector<8x64xf32>
    %84 = arith.divf %83, %82 : vector<8x64xf32>
    %85 = arith.mulf %77, %84 : vector<8x64xf32>
    %cst_39 = arith.constant 0.000000e+00 : f32
    %86 = vector.broadcast %cst_39 : f32 to vector<8x64xf32>
    %87 = arith.subf %86, %24 : vector<8x64xf32>
    %88 = math.exp %87 : vector<8x64xf32>
    %cst_40 = arith.constant 1.000000e+00 : f32
    %89 = vector.broadcast %cst_40 : f32 to vector<8x64xf32>
    %90 = arith.addf %89, %88 : vector<8x64xf32>
    %cst_41 = arith.constant 1.000000e+00 : f32
    %91 = vector.broadcast %cst_41 : f32 to vector<8x64xf32>
    %92 = arith.divf %91, %90 : vector<8x64xf32>
    %93 = arith.mulf %24, %92 : vector<8x64xf32>
    %94 = arith.mulf %85, %93 : vector<8x64xf32>
    %95 = arith.truncf %94 : vector<8x64xf32> to vector<8x64xbf16>
    %c0_42 = arith.constant 0 : index
    %c0_43 = arith.constant 0 : index
    %96 = vector.load %arg11[%c0_42, %c0_43] : memref<64x32xbf16, #tpu.memory_space<vmem>>, vector<64x32xbf16>
    %cst_44 = arith.constant dense<0.000000e+00> : vector<8x32xf32>
    %97 = tpu.matmul %95, %96, %cst_44 {dimension_numbers = #tpu.dot_dimension_numbers<[1], [0], [0], [1], [0, 0, 1, 1], [], []>} : vector<8x64xbf16>, vector<64x32xbf16>, vector<8x32xf32> -> vector<8x32xf32>
    %c0_45 = arith.constant 0 : index
    %c0_46 = arith.constant 0 : index
    %98 = vector.load %arg12[%c0_45, %c0_46] : memref<1x32xf32, #tpu.memory_space<vmem>>, vector<1x32xf32>
    %99 = vector.broadcast %98 : vector<1x32xf32> to vector<8x32xf32>
    %100 = arith.addf %97, %99 : vector<8x32xf32>
    %101 = vector.shape_cast %100 : vector<8x32xf32> to vector<1x8x32xf32>
    %c0_47 = arith.constant 0 : index
    %c0_48 = arith.constant 0 : index
    %c0_49 = arith.constant 0 : index
    %102 = vector.load %arg13[%c0_47, %c0_48, %c0_49] : memref<1x8x32xf32, #tpu.memory_space<vmem>>, vector<1x8x32xf32>
    tpu.vector_store %arg13[%c0_47, %c0_48, %c0_49], %101 {strides = array<i32>} : memref<1x8x32xf32, #tpu.memory_space<vmem>>, vector<1x8x32xf32>,
    return
  }
  func.func @transform_0(%arg0: i32) -> (i32, i32, i32) {
    %c0_i32 = arith.constant 0 : i32
    %c0_i32_0 = arith.constant 0 : i32
    %c0_i32_1 = arith.constant 0 : i32
    return %arg0, %c0_i32, %c0_i32_0 : i32, i32, i32
  }
  func.func @transform_1(%arg0: i32) -> (i32, i32) {
    %c0_i32 = arith.constant 0 : i32
    %c0_i32_0 = arith.constant 0 : i32
    %c0_i32_1 = arith.constant 0 : i32
    return %c0_i32, %c0_i32_0 : i32, i32
  }
  func.func @transform_2(%arg0: i32) -> (i32, i32) {
    %c0_i32 = arith.constant 0 : i32
    %c0_i32_0 = arith.constant 0 : i32
    %c0_i32_1 = arith.constant 0 : i32
    return %c0_i32, %c0_i32_0 : i32, i32
  }
  func.func @transform_3(%arg0: i32) -> (i32, i32) {
    %c0_i32 = arith.constant 0 : i32
    %c0_i32_0 = arith.constant 0 : i32
    %c0_i32_1 = arith.constant 0 : i32
    return %c0_i32, %c0_i32_0 : i32, i32
  }
  func.func @transform_4(%arg0: i32) -> (i32, i32, i32) {
    %c0_i32 = arith.constant 0 : i32
    %c0_i32_0 = arith.constant 0 : i32
    %c0_i32_1 = arith.constant 0 : i32
    %c0_i32_2 = arith.constant 0 : i32
    return %c0_i32, %c0_i32_0, %c0_i32_1 : i32, i32, i32
  }
  func.func @transform_5(%arg0: i32) -> (i32, i32) {
    %c0_i32 = arith.constant 0 : i32
    %c0_i32_0 = arith.constant 0 : i32
    %c0_i32_1 = arith.constant 0 : i32
    return %c0_i32, %c0_i32_0 : i32, i32
  }
  func.func @transform_6(%arg0: i32) -> (i32, i32) {
    %c0_i32 = arith.constant 0 : i32
    %c0_i32_0 = arith.constant 0 : i32
    %c0_i32_1 = arith.constant 0 : i32
    return %c0_i32, %c0_i32_0 : i32, i32
  }
  func.func @transform_7(%arg0: i32) -> (i32, i32) {
    %c0_i32 = arith.constant 0 : i32
    %c0_i32_0 = arith.constant 0 : i32
    %c0_i32_1 = arith.constant 0 : i32
    return %c0_i32, %c0_i32_0 : i32, i32
  }
  func.func @transform_8(%arg0: i32) -> (i32, i32) {
    %c0_i32 = arith.constant 0 : i32
    %c0_i32_0 = arith.constant 0 : i32
    %c0_i32_1 = arith.constant 0 : i32
    return %c0_i32, %c0_i32_0 : i32, i32
  }
  func.func @transform_9(%arg0: i32) -> (i32, i32) {
    %c0_i32 = arith.constant 0 : i32
    %c0_i32_0 = arith.constant 0 : i32
    %c0_i32_1 = arith.constant 0 : i32
    return %c0_i32, %c0_i32_0 : i32, i32
  }
  func.func @transform_10(%arg0: i32) -> (i32, i32) {
    %c0_i32 = arith.constant 0 : i32
    %c0_i32_0 = arith.constant 0 : i32
    %c0_i32_1 = arith.constant 0 : i32
    return %c0_i32, %c0_i32_0 : i32, i32
  }
  func.func @transform_11(%arg0: i32) -> (i32, i32) {
    %c0_i32 = arith.constant 0 : i32
    %c0_i32_0 = arith.constant 0 : i32
    %c0_i32_1 = arith.constant 0 : i32
    return %c0_i32, %c0_i32_0 : i32, i32
  }
  func.func @transform_12(%arg0: i32) -> (i32, i32, i32) {
    %c0_i32 = arith.constant 0 : i32
    %c0_i32_0 = arith.constant 0 : i32
    %c0_i32_1 = arith.constant 0 : i32
    return %arg0, %c0_i32, %c0_i32_0 : i32, i32, i32
  }
}

</mosaic_0001>

<llo_original>
// kernel: tpu_custom_call.1
$region0: #{tpu_custom_call.1}
  #allocation0 [shape = 'u32[]', space=smem, size = 0x4, offset = 0x4, fixed_abs, tag = 'smem constant byte address 0x4 - core index']
  #allocation1 [shape = 'u32[144,128]{1,0:T(1,128)}', space=vmem, size = 0x12000, scoped, tag = 'internal scratch']
  %s0 = inlined_call_operand.hbm [shape: f32[2,8,32], index: 0, kind: input, shape index: {}]
  %s1 = inlined_call_operand.hbm [shape: f32[1,32], index: 1, kind: input, shape index: {}]
  %s2 = inlined_call_operand.vmem [shape: bf16[32,256], index: 2, kind: input, shape index: {}]
  %s3 = inlined_call_operand.hbm [shape: f32[1,256], index: 3, kind: input, shape index: {}]
  %s4 = inlined_call_operand.vmem [shape: f32[3,8,1], index: 4, kind: input, shape index: {}]
  %s5 = inlined_call_operand.vmem [shape: f32[8,1], index: 5, kind: input, shape index: {}]
  %s6 = inlined_call_operand.vmem [shape: bf16[64,64], index: 6, kind: input, shape index: {}]
  %s7 = inlined_call_operand.hbm [shape: f32[1,64], index: 7, kind: input, shape index: {}]
  %s8 = inlined_call_operand.vmem [shape: bf16[64,96], index: 8, kind: input, shape index: {}]
  %s9 = inlined_call_operand.vmem [shape: f32[1,96], index: 9, kind: input, shape index: {}]
  %s10 = inlined_call_operand.vmem [shape: bf16[64,32], index: 10, kind: input, shape index: {}]
  %s11 = inlined_call_operand.vmem [shape: f32[1,32], index: 11, kind: input, shape index: {}]
  %s12 = inlined_call_operand.hbm [shape: f32[2,8,32], index: 12, kind: output, shape index: {}]
  %s13 = sld [smem:[#allocation0]]
  $region97: #{tpu_custom_call.1} parent=0
    _
  %s15 = ssub.s32 1, %s13
  %s16 = scalar_select 0, %s15, %s13
  $region1: #{tpu_custom_call.1} parent=0
    #allocation2 [shape = 'u8[8192]{0}', space=vmem, size = 0x2000, scoped, tag = 'input window, operand 0']
    #allocation3 [shape = 's32[2]{0}', space=sflag, size = 0x8, scoped, tag = 'scoped memory for tpu_custom_call.1']
    #allocation4 [shape = 's32[2]{0}', space=sflag, size = 0x8, scoped, tag = 'scoped memory for tpu_custom_call.1']
    #allocation5 [shape = 'u8[512]{0}', space=vmem, size = 0x400, scoped, tag = 'input window, operand 1, single buffered']
    #allocation6 [shape = 's32[1]{0}', space=sflag, size = 0x4, scoped, tag = 'scoped memory for tpu_custom_call.1']
    #allocation7 [shape = 'u8[1024]{0}', space=vmem, size = 0x400, scoped, tag = 'input window, operand 3, single buffered']
    #allocation8 [shape = 'u8[512]{0}', space=vmem, size = 0x400, scoped, tag = 'input window, operand 7, single buffered']
    #allocation9 [shape = 's32[1]{0}', space=sflag, size = 0x4, scoped, tag = 'scoped memory for tpu_custom_call.1']
    #allocation10 [shape = 'u8[8192]{0}', space=vmem, size = 0x2000, scoped, tag = 'output window, operand 0']
    %17 = vsyncpa [#allocation3], 0
    %s18 = scalar_lea.sflag [#allocation3], 1
    %19 = vsyncpa %s18, 0
    %20 = vsyncpa [#allocation6], 0
    %21 = vsyncpa [#allocation9], 0
    %22 = vsyncpa [#allocation4], 0
    %s23 = scalar_lea.sflag [#allocation4], 1
    %24 = vsyncpa %s23, 0
    loop: start=0, step=1, limit=4
    $region2: #{tpu_custom_call.1} parent=1 // loop_pre_header
      _
    $region3: #{tpu_custom_call.1} parent=1 // loop_header
      %s26 = sphi 0, %s30
      %p27 = scmp.ge.s32.totalorder %s26, 4
      %s36 = sphi 0, %s38
      %s39 = sphi 0, %s36
      %s40 = sphi 0, %s39
      %s56 = sphi 0, %s40
      %s60 = sphi 0, %s60
      %s62 = sphi 0, %s60
      %s63 = sphi 0, %s62
      %s77 = sphi 0, %s63
      %s81 = sphi 0, %s81
      %s83 = sphi 0, %s81
      %s84 = sphi 0, %s83
      %s98 = sphi 0, %s84
      %s102 = sphi 0, %s102
      %s104 = sphi 0, %s102
      %s105 = sphi 0, %s104
      %s119 = sphi 0, %s105
      %s123 = sphi 0, %s123
      %s125 = sphi 0, %s123
      %s126 = sphi 0, %s125
      %s140 = sphi 0, %s126
      %s144 = sphi 0, %s144
      %s146 = sphi 0, %s144
      %s147 = sphi 0, %s146
      %s161 = sphi 0, %s147
      %s165 = sphi 0, %s165
      %s167 = sphi 0, %s165
      %s168 = sphi 0, %s167
      %s182 = sphi 0, %s168
      %s186 = sphi 0, %s186
      %s188 = sphi 0, %s186
      %s189 = sphi 0, %s188
      %s203 = sphi 0, %s189
      %s207 = sphi 0, %s207
      %s209 = sphi 0, %s207
      %s210 = sphi 0, %s209
      %s224 = sphi 0, %s210
      %s228 = sphi 0, %s228
      %s230 = sphi 0, %s228
      %s231 = sphi 0, %s230
      %s245 = sphi 0, %s231
      %s249 = sphi 0, %s249
      %s251 = sphi 0, %s249
      %s252 = sphi 0, %s251
      %s266 = sphi 0, %s252
      %s270 = sphi 0, %s270
      %s272 = sphi 0, %s270
      %s273 = sphi 0, %s272
      %s287 = sphi 0, %s273
      %s293 = sphi 0, %s295
      %s296 = sphi 0, %s293
      %s297 = sphi 0, %s296
      %s313 = sphi 0, %s297
    $region4: #{tpu_custom_call.1} parent=1 // loop_header_branch
      %29 = sbr.rel (%p27) target = $region8
    $region5: #{tpu_custom_call.1} parent=1 // loop_body
      %s31 = ssub.s32 %s26, 1
      %s32 = ssub.s32 %s26, 2
      %s33 = sadd.s32 %s26, 1
      %s34 = ssub.s32 %s26, %s33
      %p35 = scmp.eq.s32.totalorder %s34, 0
      %s37 = sadd.s32 %s36, 1
      %s38 = scalar_select %p35, %s36, %s37
      %p41 = pneg %p35
      %p42 = scmp.eq.s32.totalorder %s26, 1
      %p43 = por %p41, %p42
      %p44 = scmp.ne.s32.totalorder %s36, %s39
      %p45 = scmp.eq.s32.totalorder %s26, 0
      %p46 = por %p44, %p45
      %p47 = scmp.ne.s32.totalorder %s36, %s39
      %p48 = scmp.eq.s32.totalorder %s31, 1
      %p49 = por %p47, %p48
      %p50 = scmp.ne.s32.totalorder %s39, %s40
      %p51 = scmp.eq.s32.totalorder %s31, 0
      %p52 = por %p50, %p51
      %p53 = scmp.ne.s32.totalorder %s39, %s40
      %p54 = scmp.eq.s32.totalorder %s32, 1
      %p55 = por %p53, %p54
      %p57 = scmp.ne.s32.totalorder %s40, %s56
      %p58 = scmp.eq.s32.totalorder %s32, 0
      %p59 = por %p57, %p58
      %s61 = sadd.s32 %s60, 1
      %p64 = scmp.eq.s32.totalorder %s26, 1
      %p65 = scmp.ne.s32.totalorder %s60, %s62
      %p66 = scmp.eq.s32.totalorder %s26, 0
      %p67 = por %p65, %p66
      %p68 = scmp.ne.s32.totalorder %s60, %s62
      %p69 = scmp.eq.s32.totalorder %s31, 1
      %p70 = por %p68, %p69
      %p71 = scmp.ne.s32.totalorder %s62, %s63
      %p72 = scmp.eq.s32.totalorder %s31, 0
      %p73 = por %p71, %p72
      %p74 = scmp.ne.s32.totalorder %s62, %s63
      %p75 = scmp.eq.s32.totalorder %s32, 1
      %p76 = por %p74, %p75
      %p78 = scmp.ne.s32.totalorder %s63, %s77
      %p79 = scmp.eq.s32.totalorder %s32, 0
      %p80 = por %p78, %p79
      %s82 = sadd.s32 %s81, 1
      %p85 = scmp.eq.s32.totalorder %s26, 1
      %p86 = scmp.ne.s32.totalorder %s81, %s83
      %p87 = scmp.eq.s32.totalorder %s26, 0
      %p88 = por %p86, %p87
      %p89 = scmp.ne.s32.totalorder %s81, %s83
      %p90 = scmp.eq.s32.totalorder %s31, 1
      %p91 = por %p89, %p90
      %p92 = scmp.ne.s32.totalorder %s83, %s84
      %p93 = scmp.eq.s32.totalorder %s31, 0
      %p94 = por %p92, %p93
      %p95 = scmp.ne.s32.totalorder %s83, %s84
      %p96 = scmp.eq.s32.totalorder %s32, 1
      %p97 = por %p95, %p96
      %p99 = scmp.ne.s32.totalorder %s84, %s98
      %p100 = scmp.eq.s32.totalorder %s32, 0
      %p101 = por %p99, %p100
      %s103 = sadd.s32 %s102, 1
      %p106 = scmp.eq.s32.totalorder %s26, 1
      %p107 = scmp.ne.s32.totalorder %s102, %s104
      %p108 = scmp.eq.s32.totalorder %s26, 0
      %p109 = por %p107, %p108
      %p110 = scmp.ne.s32.totalorder %s102, %s104
      %p111 = scmp.eq.s32.totalorder %s31, 1
      %p112 = por %p110, %p111
      %p113 = scmp.ne.s32.totalorder %s104, %s105
      %p114 = scmp.eq.s32.totalorder %s31, 0
      %p115 = por %p113, %p114
      %p116 = scmp.ne.s32.totalorder %s104, %s105
      %p117 = scmp.eq.s32.totalorder %s32, 1
      %p118 = por %p116, %p117
      %p120 = scmp.ne.s32.totalorder %s105, %s119
      %p121 = scmp.eq.s32.totalorder %s32, 0
      %p122 = por %p120, %p121
      %s124 = sadd.s32 %s123, 1
      %p127 = scmp.eq.s32.totalorder %s26, 1
      %p128 = scmp.ne.s32.totalorder %s123, %s125
      %p129 = scmp.eq.s32.totalorder %s26, 0
      %p130 = por %p128, %p129
      %p131 = scmp.ne.s32.totalorder %s123, %s125
      %p132 = scmp.eq.s32.totalorder %s31, 1
      %p133 = por %p131, %p132
      %p134 = scmp.ne.s32.totalorder %s125, %s126
      %p135 = scmp.eq.s32.totalorder %s31, 0
      %p136 = por %p134, %p135
      %p137 = scmp.ne.s32.totalorder %s125, %s126
      %p138 = scmp.eq.s32.totalorder %s32, 1
      %p139 = por %p137, %p138
      %p141 = scmp.ne.s32.totalorder %s126, %s140
      %p142 = scmp.eq.s32.totalorder %s32, 0
      %p143 = por %p141, %p142
      %s145 = sadd.s32 %s144, 1
      %p148 = scmp.eq.s32.totalorder %s26, 1
      %p149 = scmp.ne.s32.totalorder %s144, %s146
      %p150 = scmp.eq.s32.totalorder %s26, 0
      %p151 = por %p149, %p150
      %p152 = scmp.ne.s32.totalorder %s144, %s146
      %p153 = scmp.eq.s32.totalorder %s31, 1
      %p154 = por %p152, %p153
      %p155 = scmp.ne.s32.totalorder %s146, %s147
      %p156 = scmp.eq.s32.totalorder %s31, 0
      %p157 = por %p155, %p156
      %p158 = scmp.ne.s32.totalorder %s146, %s147
      %p159 = scmp.eq.s32.totalorder %s32, 1
      %p160 = por %p158, %p159
      %p162 = scmp.ne.s32.totalorder %s147, %s161
      %p163 = scmp.eq.s32.totalorder %s32, 0
      %p164 = por %p162, %p163
      %s166 = sadd.s32 %s165, 1
      %p169 = scmp.eq.s32.totalorder %s26, 1
      %p170 = scmp.ne.s32.totalorder %s165, %s167
      %p171 = scmp.eq.s32.totalorder %s26, 0
      %p172 = por %p170, %p171
      %p173 = scmp.ne.s32.totalorder %s165, %s167
      %p174 = scmp.eq.s32.totalorder %s31, 1
      %p175 = por %p173, %p174
      %p176 = scmp.ne.s32.totalorder %s167, %s168
      %p177 = scmp.eq.s32.totalorder %s31, 0
      %p178 = por %p176, %p177
      %p179 = scmp.ne.s32.totalorder %s167, %s168
      %p180 = scmp.eq.s32.totalorder %s32, 1
      %p181 = por %p179, %p180
      %p183 = scmp.ne.s32.totalorder %s168, %s182
      %p184 = scmp.eq.s32.totalorder %s32, 0
      %p185 = por %p183, %p184
      %s187 = sadd.s32 %s186, 1
      %p190 = scmp.eq.s32.totalorder %s26, 1
      %p191 = scmp.ne.s32.totalorder %s186, %s188
      %p192 = scmp.eq.s32.totalorder %s26, 0
      %p193 = por %p191, %p192
      %p194 = scmp.ne.s32.totalorder %s186, %s188
      %p195 = scmp.eq.s32.totalorder %s31, 1
      %p196 = por %p194, %p195
      %p197 = scmp.ne.s32.totalorder %s188, %s189
      %p198 = scmp.eq.s32.totalorder %s31, 0
      %p199 = por %p197, %p198
      %p200 = scmp.ne.s32.totalorder %s188, %s189
      %p201 = scmp.eq.s32.totalorder %s32, 1
      %p202 = por %p200, %p201
      %p204 = scmp.ne.s32.totalorder %s189, %s203
      %p205 = scmp.eq.s32.totalorder %s32, 0
      %p206 = por %p204, %p205
      %s208 = sadd.s32 %s207, 1
      %p211 = scmp.eq.s32.totalorder %s26, 1
      %p212 = scmp.ne.s32.totalorder %s207, %s209
      %p213 = scmp.eq.s32.totalorder %s26, 0
      %p214 = por %p212, %p213
      %p215 = scmp.ne.s32.totalorder %s207, %s209
      %p216 = scmp.eq.s32.totalorder %s31, 1
      %p217 = por %p215, %p216
      %p218 = scmp.ne.s32.totalorder %s209, %s210
      %p219 = scmp.eq.s32.totalorder %s31, 0
      %p220 = por %p218, %p219
      %p221 = scmp.ne.s32.totalorder %s209, %s210
      %p222 = scmp.eq.s32.totalorder %s32, 1
      %p223 = por %p221, %p222
      %p225 = scmp.ne.s32.totalorder %s210, %s224
      %p226 = scmp.eq.s32.totalorder %s32, 0
      %p227 = por %p225, %p226
      %s229 = sadd.s32 %s228, 1
      %p232 = scmp.eq.s32.totalorder %s26, 1
      %p233 = scmp.ne.s32.totalorder %s228, %s230
      %p234 = scmp.eq.s32.totalorder %s26, 0
      %p235 = por %p233, %p234
      %p236 = scmp.ne.s32.totalorder %s228, %s230
      %p237 = scmp.eq.s32.totalorder %s31, 1
      %p238 = por %p236, %p237
      %p239 = scmp.ne.s32.totalorder %s230, %s231
      %p240 = scmp.eq.s32.totalorder %s31, 0
      %p241 = por %p239, %p240
      %p242 = scmp.ne.s32.totalorder %s230, %s231
      %p243 = scmp.eq.s32.totalorder %s32, 1
      %p244 = por %p242, %p243
      %p246 = scmp.ne.s32.totalorder %s231, %s245
      %p247 = scmp.eq.s32.totalorder %s32, 0
      %p248 = por %p246, %p247
      %s250 = sadd.s32 %s249, 1
      %p253 = scmp.eq.s32.totalorder %s26, 1
      %p254 = scmp.ne.s32.totalorder %s249, %s251
      %p255 = scmp.eq.s32.totalorder %s26, 0
      %p256 = por %p254, %p255
      %p257 = scmp.ne.s32.totalorder %s249, %s251
      %p258 = scmp.eq.s32.totalorder %s31, 1
      %p259 = por %p257, %p258
      %p260 = scmp.ne.s32.totalorder %s251, %s252
      %p261 = scmp.eq.s32.totalorder %s31, 0
      %p262 = por %p260, %p261
      %p263 = scmp.ne.s32.totalorder %s251, %s252
      %p264 = scmp.eq.s32.totalorder %s32, 1
      %p265 = por %p263, %p264
      %p267 = scmp.ne.s32.totalorder %s252, %s266
      %p268 = scmp.eq.s32.totalorder %s32, 0
      %p269 = por %p267, %p268
      %s271 = sadd.s32 %s270, 1
      %p274 = scmp.eq.s32.totalorder %s26, 1
      %p275 = scmp.ne.s32.totalorder %s270, %s272
      %p276 = scmp.eq.s32.totalorder %s26, 0
      %p277 = por %p275, %p276
      %p278 = scmp.ne.s32.totalorder %s270, %s272
      %p279 = scmp.eq.s32.totalorder %s31, 1
      %p280 = por %p278, %p279
      %p281 = scmp.ne.s32.totalorder %s272, %s273
      %p282 = scmp.eq.s32.totalorder %s31, 0
      %p283 = por %p281, %p282
      %p284 = scmp.ne.s32.totalorder %s272, %s273
      %p285 = scmp.eq.s32.totalorder %s32, 1
      %p286 = por %p284, %p285
      %p288 = scmp.ne.s32.totalorder %s273, %s287
      %p289 = scmp.eq.s32.totalorder %s32, 0
      %p290 = por %p288, %p289
      %s291 = ssub.s32 %s26, %s33
      %p292 = scmp.eq.s32.totalorder %s291, 0
      %s294 = sadd.s32 %s293, 1
      %s295 = scalar_select %p292, %s293, %s294
      %p298 = pneg %p292
      %p299 = scmp.eq.s32.totalorder %s26, 1
      %p300 = por %p298, %p299
      %p301 = scmp.ne.s32.totalorder %s293, %s296
      %p302 = scmp.eq.s32.totalorder %s26, 0
      %p303 = por %p301, %p302
      %p304 = scmp.ne.s32.totalorder %s293, %s296
      %p305 = scmp.eq.s32.totalorder %s31, 1
      %p306 = por %p304, %p305
      %p307 = scmp.ne.s32.totalorder %s296, %s297
      %p308 = scmp.eq.s32.totalorder %s31, 0
      %p309 = por %p307, %p308
      %p310 = scmp.ne.s32.totalorder %s296, %s297
      %p311 = scmp.eq.s32.totalorder %s32, 1
      %p312 = por %p310, %p311
      %p314 = scmp.ne.s32.totalorder %s297, %s313
      %p315 = scmp.eq.s32.totalorder %s32, 0
      %p316 = por %p314, %p315
      %p317 = scmp.le.s32.totalorder 1, %s26
      %p318 = scmp.lt.s32.totalorder %s26, 3
      %p319 = pnand %p317, %p318
      %p320 = pneg %p319
      // Predicated region
      $region9: #{tpu_custom_call.1} parent=5 // pred_check
        _
      $region10: #{tpu_custom_call.1} parent=5 // pred_check_branch
        %322 = sbr.rel (%p319) target = $region12
      $region11: #{tpu_custom_call.1} parent=5 // pred_region
        %s323 = ssub.s32 %s26, 1
        // Predicated region
        $region13: #{tpu_custom_call.1} parent=11 // pred_check
          %p324 = pneg %p73
        $region14: #{tpu_custom_call.1} parent=11 // pred_check_branch
          %326 = sbr.rel (%p324) target = $region16
        $region15: #{tpu_custom_call.1} parent=11 // pred_region
          %s328 = ssub.s32 16, 16
          %329 = vsyncadd [#allocation6], %s328
          %s331 = sshll.u32 [#allocation5], 4
          %s332 = int_to_ptr.vmem [resolvable:$true] %s331
          %334 = dma.hbm_to_vmem [thread:$0]  %s1, 16, %s332, [#allocation6]
        $region16: #{tpu_custom_call.1} parent=11 // pred_fallthru
          _
        // Predicated region
        $region17: #{tpu_custom_call.1} parent=11 // pred_check
          %p335 = pneg %p94
        $region18: #{tpu_custom_call.1} parent=11 // pred_check_branch
          %337 = sbr.rel (%p335) target = $region20
        $region19: #{tpu_custom_call.1} parent=11 // pred_region
          _
        $region20: #{tpu_custom_call.1} parent=11 // pred_fallthru
          _
        // Predicated region
        $region21: #{tpu_custom_call.1} parent=11 // pred_check
          %p338 = pneg %p115
        $region22: #{tpu_custom_call.1} parent=11 // pred_check_branch
          %340 = sbr.rel (%p338) target = $region24
        $region23: #{tpu_custom_call.1} parent=11 // pred_region
          %s342 = ssub.s32 32, 32
          %343 = vsyncadd [#allocation6], %s342
          %s345 = sshll.u32 [#allocation7], 4
          %s346 = int_to_ptr.vmem [resolvable:$true] %s345
          %348 = dma.hbm_to_vmem [thread:$0]  %s3, 32, %s346, [#allocation6]
        $region24: #{tpu_custom_call.1} parent=11 // pred_fallthru
          _
        // Predicated region
        $region25: #{tpu_custom_call.1} parent=11 // pred_check
          %p349 = pneg %p136
        $region26: #{tpu_custom_call.1} parent=11 // pred_check_branch
          %351 = sbr.rel (%p349) target = $region28
        $region27: #{tpu_custom_call.1} parent=11 // pred_region
          _
        $region28: #{tpu_custom_call.1} parent=11 // pred_fallthru
          _
        // Predicated region
        $region29: #{tpu_custom_call.1} parent=11 // pred_check
          %p352 = pneg %p157
        $region30: #{tpu_custom_call.1} parent=11 // pred_check_branch
          %354 = sbr.rel (%p352) target = $region32
        $region31: #{tpu_custom_call.1} parent=11 // pred_region
          _
        $region32: #{tpu_custom_call.1} parent=11 // pred_fallthru
          _
        // Predicated region
        $region33: #{tpu_custom_call.1} parent=11 // pred_check
          %p355 = pneg %p178
        $region34: #{tpu_custom_call.1} parent=11 // pred_check_branch
          %357 = sbr.rel (%p355) target = $region36
        $region35: #{tpu_custom_call.1} parent=11 // pred_region
          _
        $region36: #{tpu_custom_call.1} parent=11 // pred_fallthru
          _
        // Predicated region
        $region37: #{tpu_custom_call.1} parent=11 // pred_check
          %p358 = pneg %p199
        $region38: #{tpu_custom_call.1} parent=11 // pred_check_branch
          %360 = sbr.rel (%p358) target = $region40
        $region39: #{tpu_custom_call.1} parent=11 // pred_region
          %s362 = ssub.s32 16, 16
          %363 = vsyncadd [#allocation9], %s362
          %s365 = sshll.u32 [#allocation8], 4
          %s366 = int_to_ptr.vmem [resolvable:$true] %s365
          %368 = dma.hbm_to_vmem [thread:$0]  %s7, 16, %s366, [#allocation9]
        $region40: #{tpu_custom_call.1} parent=11 // pred_fallthru
          _
        // Predicated region
        $region41: #{tpu_custom_call.1} parent=11 // pred_check
          %p369 = pneg %p220
        $region42: #{tpu_custom_call.1} parent=11 // pred_check_branch
          %371 = sbr.rel (%p369) target = $region44
        $region43: #{tpu_custom_call.1} parent=11 // pred_region
          _
        $region44: #{tpu_custom_call.1} parent=11 // pred_fallthru
          _
        // Predicated region
        $region45: #{tpu_custom_call.1} parent=11 // pred_check
          %p372 = pneg %p241
        $region46: #{tpu_custom_call.1} parent=11 // pred_check_branch
          %374 = sbr.rel (%p372) target = $region48
        $region47: #{tpu_custom_call.1} parent=11 // pred_region
          _
        $region48: #{tpu_custom_call.1} parent=11 // pred_fallthru
          _
        // Predicated region
        $region49: #{tpu_custom_call.1} parent=11 // pred_check
          %p375 = pneg %p262
        $region50: #{tpu_custom_call.1} parent=11 // pred_check_branch
          %377 = sbr.rel (%p375) target = $region52
        $region51: #{tpu_custom_call.1} parent=11 // pred_region
          _
        $region52: #{tpu_custom_call.1} parent=11 // pred_fallthru
          _
        // Predicated region
        $region53: #{tpu_custom_call.1} parent=11 // pred_check
          %p378 = pneg %p283
        $region54: #{tpu_custom_call.1} parent=11 // pred_check_branch
          %380 = sbr.rel (%p378) target = $region56
        $region55: #{tpu_custom_call.1} parent=11 // pred_region
          _
        $region56: #{tpu_custom_call.1} parent=11 // pred_fallthru
          _
      $region12: #{tpu_custom_call.1} parent=5 // pred_fallthru
        _
      %p381 = scmp.lt.s32.totalorder %s26, 2
      // Predicated region
      $region57: #{tpu_custom_call.1} parent=5 // pred_check
        %p382 = pneg %p381
      $region58: #{tpu_custom_call.1} parent=5 // pred_check_branch
        %384 = sbr.rel (%p382) target = $region60
      $region59: #{tpu_custom_call.1} parent=5 // pred_region
        // Predicated region
        $region61: #{tpu_custom_call.1} parent=59 // pred_check
          %p385 = pneg %p46
        $region62: #{tpu_custom_call.1} parent=59 // pred_check_branch
          %387 = sbr.rel (%p385) target = $region64
        $region63: #{tpu_custom_call.1} parent=59 // pred_region
          %s388 = sand.u32 %s36, 1
          %s389 = scalar_lea.sflag [#allocation3], %s388
          %s390 = sand.u32 %s36, 1
          %s391 = smul.addr %s390, 8
          %s392 = scalar_lea.vmem [#allocation2], %s391
          %s394 = ssub.s32 128, 128
          %395 = vsyncadd %s389, %s394
          %s396 = smul.addr %s26, 128
          %s397 = scalar_lea.hbm %s0, %s396
          %s399 = sshll.u32 %s392, 4
          %s400 = int_to_ptr.vmem [resolvable:$true] %s399
          %402 = dma.hbm_to_vmem [thread:$0]  %s397, 128, %s400, %s389
        $region64: #{tpu_custom_call.1} parent=59 // pred_fallthru
          _
      $region60: #{tpu_custom_call.1} parent=5 // pred_fallthru
        _
      %p403 = scmp.le.s32.totalorder 1, %s26
      %p404 = scmp.lt.s32.totalorder %s26, 3
      %p405 = pnand %p403, %p404
      %p406 = pneg %p405
      // Predicated region
      $region65: #{tpu_custom_call.1} parent=5 // pred_check
        _
      $region66: #{tpu_custom_call.1} parent=5 // pred_check_branch
        %408 = sbr.rel (%p405) target = $region68
      $region67: #{tpu_custom_call.1} parent=5 // pred_region
        %s409 = ssub.s32 %s26, 1
        %s410 = sand.u32 %s39, 1
        %s411 = scalar_lea.sflag [#allocation3], %s410
        %s412 = sand.u32 %s39, 1
        %s413 = smul.addr %s412, 8
        %s414 = scalar_lea.vmem [#allocation2], %s413
        // Predicated region
        $region69: #{tpu_custom_call.1} parent=67 // pred_check
          %p415 = pneg %p52
        $region70: #{tpu_custom_call.1} parent=67 // pred_check_branch
          %417 = sbr.rel (%p415) target = $region72
        $region71: #{tpu_custom_call.1} parent=67 // pred_region
          %418 = dma.done %s411, 128
        $region72: #{tpu_custom_call.1} parent=67 // pred_fallthru
          _
        // Predicated region
        $region73: #{tpu_custom_call.1} parent=67 // pred_check
          %p419 = pneg %p73
        $region74: #{tpu_custom_call.1} parent=67 // pred_check_branch
          %421 = sbr.rel (%p419) target = $region76
        $region75: #{tpu_custom_call.1} parent=67 // pred_region
          %422 = dma.done [#allocation6], 16
        $region76: #{tpu_custom_call.1} parent=67 // pred_fallthru
          _
        // Predicated region
        $region77: #{tpu_custom_call.1} parent=67 // pred_check
          %p423 = pneg %p115
        $region78: #{tpu_custom_call.1} parent=67 // pred_check_branch
          %425 = sbr.rel (%p423) target = $region80
        $region79: #{tpu_custom_call.1} parent=67 // pred_region
          %426 = dma.done [#allocation6], 32
        $region80: #{tpu_custom_call.1} parent=67 // pred_fallthru
          _
        // Predicated region
        $region81: #{tpu_custom_call.1} parent=67 // pred_check
          %p427 = pneg %p199
        $region82: #{tpu_custom_call.1} parent=67 // pred_check_branch
          %429 = sbr.rel (%p427) target = $region84
        $region83: #{tpu_custom_call.1} parent=67 // pred_region
          %430 = dma.done [#allocation9], 16
        $region84: #{tpu_custom_call.1} parent=67 // pred_fallthru
          _
        %s431 = sand.u32 %s39, 1
        %s432 = scalar_lea.sflag [#allocation3], %s431
        %s433 = sand.u32 %s39, 1
        %s434 = smul.addr %s433, 8
        %s435 = scalar_lea.vmem [#allocation2], %s434
        %p436 = pneg %p52
        %p437 = pneg %p49
        %p438 = pneg %p73
        %p439 = pneg %p70
        %p440 = pneg %p94
        %p441 = pneg %p91
        %p442 = pneg %p115
        %p443 = pneg %p112
        %p444 = pneg %p136
        %p445 = pneg %p133
        %p446 = pneg %p157
        %p447 = pneg %p154
        %p448 = pneg %p178
        %p449 = pneg %p175
        %p450 = pneg %p199
        %p451 = pneg %p196
        %p452 = pneg %p220
        %p453 = pneg %p217
        %p454 = pneg %p241
        %p455 = pneg %p238
        %p456 = pneg %p262
        %p457 = pneg %p259
        %p458 = pneg %p283
        %p459 = pneg %p280
        %p460 = pneg %p309
        %p461 = pneg %p306
        %s462 = sand.u32 %s296, 1
        %s463 = scalar_lea.sflag [#allocation4], %s462
        %s464 = sand.u32 %s296, 1
        %s465 = smul.addr %s464, 8
        %s466 = scalar_lea.vmem [#allocation10], %s465
        %v468 = vld [vmem:[%s414] sm:$0xff]
        %v469 = vmul.f32 %v468, %v468
        %vm470 = vcmask 261120
        %v471 = vsel %vm470, %v469, 0.0
        %472 = vadd.xlane.f32.xlu0 %v471
        %v473 = vpop.xlane.xlu0 %472
        %v474 = vrcp.pop 32.0
        %v475 = vmul.f32 %v473, %v474
        %v476 = vadd.f32 %v475, 1e-05
        %v477 = vrsqrt.pop %v476
        %v478 = vmul.f32 %v468, %v477
        %v479 = vld [vmem:[#allocation5] sm:$0x1]
        %v481 = vlaneseq
        %v482 = vshrl.u32 %v481, 7
        %v483 = vsub.s32 0, %v482
        %v484 = vrot.slane %v479, %v483
        %v486 = vmul.f32 %v478, %v484
        %v487 = vpack.c.bf16 %v486, %v486
        %v488 = vld [vmem:[%s2] sm:$0xff]
        %v489 = vld [vmem:[%s2 + $0x8] sm:$0xff]
        %v490 = vld [vmem:[%s2 + $0x10] sm:$0xff]
        %v491 = vld [vmem:[%s2 + $0x18] sm:$0xff]
        %v492 = vld [vmem:[#allocation7] sm:$0x3]
        %v494 = vlaneseq
        %v495 = vshrl.u32 %v494, 7
        %v496 = vsub.s32 0, %v495
        %v497 = vrot.slane %v492, %v496
        %v498 = vlaneseq
        %v499 = vshrl.u32 %v498, 7
        %v500 = vsub.s32 1, %v499
        %v501 = vrot.slane %v492, %v500
        %v508 = vunpack.c.l.b16 %v488
        %v509 = vunpack.c.h.b16 %v488
        %v510 = vunpack.c.l.b16 %v489
        %v511 = vunpack.c.h.b16 %v489
        %v512 = vunpack.c.l.b16 %v490
        %v513 = vunpack.c.h.b16 %v490
        %v514 = vunpack.c.l.b16 %v491
        %v515 = vunpack.c.h.b16 %v491
        %v516 = vpack.c.b16 %v510, %v508
        %v517 = vpack.c.b16 %v511, %v509
        %v518 = vpack.c.b16 %v514, %v512
        %v519 = vpack.c.b16 %v515, %v513
        %v525 = vsel %vm470, %v487, 0
        %527 = vmatprep.subr.bf16.mxu0 0
        %528 = vmatpush1.bf16.msra.mxu0 0
        %529 = vmatprep.subr.bf16.mxu0 0
        %530 = vmatpush1.bf16.msra.mxu0 0
        %531 = vmatprep.subr.bf16.mxu0 0
        %532 = vmatpush1.bf16.msra.mxu0 0
        %533 = vmatprep.subr.bf16.mxu0 0
        %534 = vmatpush1.bf16.msra.mxu0 0
        %535 = vmatprep.subr.bf16.mxu0 0
        %536 = vmatpush1.bf16.msra.mxu0 0
        %537 = vmatprep.subr.bf16.mxu0 0
        %538 = vmatpush1.bf16.msra.mxu0 0
        %539 = vmatprep.subr.bf16.mxu0 %v519
        %540 = vmatpush1.bf16.msra.mxu0 %v518
        %541 = vmatprep.subr.bf16.mxu0 %v517
        %542 = vmatpush1.bf16.msra.mxu0 %v516
        %543 = vmatprep.subr.bf16.mxu0 0
        %544 = vmatpush2.bf16.msra.mxu0 0
        %545 = vmatprep.subr.bf16.mxu0 0
        %546 = vmatpush2.bf16.msra.mxu0 0
        %547 = vmatprep.subr.bf16.mxu0 0
        %548 = vmatpush2.bf16.msra.mxu0 0
        %549 = vmatprep.subr.bf16.mxu0 0
        %550 = vmatpush2.bf16.msra.mxu0 0
        %551 = vmatprep.subr.bf16.mxu0 0
        %552 = vmatpush2.bf16.msra.mxu0 0
        %553 = vmatprep.subr.bf16.mxu0 0
        %554 = vmatpush2.bf16.msra.mxu0 0
        %555 = vmatprep.subr.bf16.mxu0 0
        %556 = vmatpush2.bf16.msra.mxu0 0
        %557 = vmatprep.subr.bf16.mxu0 0
        %558 = vmatpush2.bf16.msra.mxu0 0
        %559 = vmatprep.mubr.bf16.mxu0 0
        %560 = vmatmul.mubr.bf16.gmra.mxu0 %v525
        %v561 = vpop.f32.mrf.mxu0
        %v562 = vadd.f32 %v497, %v561
        %v563 = vpop.f32.mrf.mxu0
        %v564 = vadd.f32 %v501, %v563
        %v565 = vpop.f32.mrf.mxu0
        %v566 = vpop.f32.mrf.mxu0
        %567 = vdwg.mxu0
        %v568 = vld [vmem:[%s4] sm:$0xff]
        %570 = vset.pattern.permute.xlu0 0
        %571 = vperm.xlu0 %570, %v568
        %v572 = vpop.permute.xlu0 %571
        %v574 = vmul.f32 %v572, %v562
        %s575 = scalar_lea.vmem %s4, 8
        %v576 = vld [vmem:[%s575] sm:$0xff]
        %578 = vset.pattern.permute.xlu0 0
        %579 = vperm.xlu0 %578, %v576
        %v580 = vpop.permute.xlu0 %579
        %v582 = vmul.f32 %v580, %v562
        %584 = vrot.lane.b32.xlu0 %v582, 64
        %v585 = vpop.permute.xlu0 %584
        %v587 = vadd.f32 %v574, %v585
        %s588 = scalar_lea.vmem %s4, 16
        %v589 = vld [vmem:[%s588] sm:$0xff]
        %591 = vset.pattern.permute.xlu0 0
        %592 = vperm.xlu0 %591, %v589
        %v593 = vpop.permute.xlu0 %592
        %v595 = vmul.f32 %v593, %v564
        %597 = vrot.lane.b32.xlu0 %v595, 64
        %v598 = vpop.permute.xlu0 %597
        %v600 = vadd.f32 %v587, %v598
        %v601 = vld [vmem:[%s5] sm:$0xff]
        %603 = vset.pattern.permute.xlu0 0
        %604 = vperm.xlu0 %603, %v601
        %v605 = vpop.permute.xlu0 %604
        %v607 = vadd.f32 %v600, %v605
        %v608 = vsub.f32 0.0, %v607
        %v609 = vmul.f32 %v608, 1.442695
        %v610 = vpow.pop %v609
        %v611 = vadd.f32 %v610, 1.0
        %v612 = vrcp.pop %v611
        %v613 = vmul.f32 1.0, %v612
        %v614 = vmul.f32 %v607, %v613
        %v615 = vpack.c.bf16 %v614, %v614
        %v616 = vld [vmem:[%s6] sm:$0xf]
        %v617 = vld [vmem:[%s6 + $0x4] sm:$0xf]
        %v618 = vld [vmem:[%s6 + $0x8] sm:$0xf]
        %v619 = vld [vmem:[%s6 + $0xc] sm:$0xf]
        %v620 = vld [vmem:[%s6 + $0x10] sm:$0xf]
        %v621 = vld [vmem:[%s6 + $0x14] sm:$0xf]
        %v622 = vld [vmem:[%s6 + $0x18] sm:$0xf]
        %v623 = vld [vmem:[%s6 + $0x1c] sm:$0xf]
        %v624 = vld [vmem:[#allocation8] sm:$0x1]
        %v626 = vlaneseq
        %v627 = vshrl.u32 %v626, 7
        %v628 = vsub.s32 0, %v627
        %v629 = vrot.slane %v624, %v628
        %632 = vrot.lane.b32.xlu0 %v615, 64
        %v633 = vpop.permute.xlu0 %632
        %v642 = vunpack.c.l.b16 %v616
        %v643 = vunpack.c.l.b16 %v617
        %v644 = vunpack.c.l.b16 %v618
        %v645 = vunpack.c.l.b16 %v619
        %v646 = vunpack.c.l.b16 %v620
        %v647 = vunpack.c.l.b16 %v621
        %v648 = vunpack.c.l.b16 %v622
        %v649 = vunpack.c.l.b16 %v623
        %v650 = vpack.c.b16 %v643, %v642
        %v651 = vpack.c.b16 %v645, %v644
        %v652 = vpack.c.b16 %v647, %v646
        %v653 = vpack.c.b16 %v649, %v648
        %vm658 = vcmask 523264
        %v660 = vsel %vm658, %v633, 0
        %662 = vmatprep.subr.bf16.mxu0 0
        %663 = vmatpush1.bf16.msra.mxu0 0
        %664 = vmatprep.subr.bf16.mxu0 0
        %665 = vmatpush1.bf16.msra.mxu0 0
        %666 = vmatprep.subr.bf16.mxu0 0
        %667 = vmatpush1.bf16.msra.mxu0 0
        %668 = vmatprep.subr.bf16.mxu0 0
        %669 = vmatpush1.bf16.msra.mxu0 0
        %670 = vmatprep.subr.bf16.mxu0 0
        %671 = vmatpush1.bf16.msra.mxu0 %v653
        %672 = vmatprep.subr.bf16.mxu0 0
        %673 = vmatpush1.bf16.msra.mxu0 %v652
        %674 = vmatprep.subr.bf16.mxu0 0
        %675 = vmatpush1.bf16.msra.mxu0 %v651
        %676 = vmatprep.subr.bf16.mxu0 0
        %677 = vmatpush1.bf16.msra.mxu0 %v650
        %678 = vmatprep.subr.bf16.mxu0 0
        %679 = vmatpush2.bf16.msra.mxu0 0
        %680 = vmatprep.subr.bf16.mxu0 0
        %681 = vmatpush2.bf16.msra.mxu0 0
        %682 = vmatprep.subr.bf16.mxu0 0
        %683 = vmatpush2.bf16.msra.mxu0 0
        %684 = vmatprep.subr.bf16.mxu0 0
        %685 = vmatpush2.bf16.msra.mxu0 0
        %686 = vmatprep.subr.bf16.mxu0 0
        %687 = vmatpush2.bf16.msra.mxu0 0
        %688 = vmatprep.subr.bf16.mxu0 0
        %689 = vmatpush2.bf16.msra.mxu0 0
        %690 = vmatprep.subr.bf16.mxu0 0
        %691 = vmatpush2.bf16.msra.mxu0 0
        %692 = vmatprep.subr.bf16.mxu0 0
        %693 = vmatpush2.bf16.msra.mxu0 0
        %694 = vmatprep.mubr.bf16.mxu0 0
        %695 = vmatmul.mubr.bf16.gmra.mxu0 %v660
        %v696 = vpop.f32.mrf.mxu0
        %v697 = vadd.f32 %v629, %v696
        %v698 = vpop.f32.mrf.mxu0
        %v699 = vpop.f32.mrf.mxu0
        %v700 = vpop.f32.mrf.mxu0
        %701 = vdwg.mxu0
        %v702 = vpack.c.bf16 %v697, %v697
        %v703 = vld [vmem:[%s8] sm:$0xf]
        %v704 = vld [vmem:[%s8 + $0x4] sm:$0xf]
        %v705 = vld [vmem:[%s8 + $0x8] sm:$0xf]
        %v706 = vld [vmem:[%s8 + $0xc] sm:$0xf]
        %v707 = vld [vmem:[%s8 + $0x10] sm:$0xf]
        %v708 = vld [vmem:[%s8 + $0x14] sm:$0xf]
        %v709 = vld [vmem:[%s8 + $0x18] sm:$0xf]
        %v710 = vld [vmem:[%s8 + $0x1c] sm:$0xf]
        %v711 = vld [vmem:[%s9] sm:$0x1]
        %v713 = vlaneseq
        %v714 = vshrl.u32 %v713, 7
        %v715 = vsub.s32 0, %v714
        %v716 = vrot.slane %v711, %v715
        %v726 = vunpack.c.l.b16 %v703
        %v727 = vunpack.c.l.b16 %v704
        %v728 = vunpack.c.l.b16 %v705
        %v729 = vunpack.c.l.b16 %v706
        %v730 = vunpack.c.l.b16 %v707
        %v731 = vunpack.c.l.b16 %v708
        %v732 = vunpack.c.l.b16 %v709
        %v733 = vunpack.c.l.b16 %v710
        %v734 = vpack.c.b16 %v727, %v726
        %v735 = vpack.c.b16 %v729, %v728
        %v736 = vpack.c.b16 %v731, %v730
        %v737 = vpack.c.b16 %v733, %v732
        %v743 = vsel %vm658, %v702, 0
        %745 = vmatprep.subr.bf16.mxu0 0
        %746 = vmatpush1.bf16.msra.mxu0 0
        %747 = vmatprep.subr.bf16.mxu0 0
        %748 = vmatpush1.bf16.msra.mxu0 0
        %749 = vmatprep.subr.bf16.mxu0 0
        %750 = vmatpush1.bf16.msra.mxu0 0
        %751 = vmatprep.subr.bf16.mxu0 0
        %752 = vmatpush1.bf16.msra.mxu0 0
        %753 = vmatprep.subr.bf16.mxu0 0
        %754 = vmatpush1.bf16.msra.mxu0 %v737
        %755 = vmatprep.subr.bf16.mxu0 0
        %756 = vmatpush1.bf16.msra.mxu0 %v736
        %757 = vmatprep.subr.bf16.mxu0 0
        %758 = vmatpush1.bf16.msra.mxu0 %v735
        %759 = vmatprep.subr.bf16.mxu0 0
        %760 = vmatpush1.bf16.msra.mxu0 %v734
        %761 = vmatprep.subr.bf16.mxu0 0
        %762 = vmatpush2.bf16.msra.mxu0 0
        %763 = vmatprep.subr.bf16.mxu0 0
        %764 = vmatpush2.bf16.msra.mxu0 0
        %765 = vmatprep.subr.bf16.mxu0 0
        %766 = vmatpush2.bf16.msra.mxu0 0
        %767 = vmatprep.subr.bf16.mxu0 0
        %768 = vmatpush2.bf16.msra.mxu0 0
        %769 = vmatprep.subr.bf16.mxu0 0
        %770 = vmatpush2.bf16.msra.mxu0 0
        %771 = vmatprep.subr.bf16.mxu0 0
        %772 = vmatpush2.bf16.msra.mxu0 0
        %773 = vmatprep.subr.bf16.mxu0 0
        %774 = vmatpush2.bf16.msra.mxu0 0
        %775 = vmatprep.subr.bf16.mxu0 0
        %776 = vmatpush2.bf16.msra.mxu0 0
        %777 = vmatprep.mubr.bf16.mxu0 0
        %778 = vmatmul.mubr.bf16.gmra.mxu0 %v743
        %v779 = vpop.f32.mrf.mxu0
        %v780 = vadd.f32 %v716, %v779
        %v781 = vpop.f32.mrf.mxu0
        %v782 = vpop.f32.mrf.mxu0
        %v783 = vpop.f32.mrf.mxu0
        %784 = vdwg.mxu0
        %vm785 = vcmp.gt.f32.partialorder %v780, 20.0
        %v786 = vmin.f32 %v780, 20.0
        %v787 = vmul.f32 %v786, 1.442695
        %v788 = vpow.pop %v787
        %v789 = vadd.f32 %v788, 1.0
        %v790 = vlog2.pop %v789
        %v791 = vmul.f32 %v790, 0.6931472
        %v792 = vmul.f32 -0.5, %v788
        %v793 = vadd.f32 %v792, 1.0
        %v794 = vmul.f32 %v793, %v788
        %v795 = vand.u32 2147483647, %v788
        %vm796 = vcmp.lt.f32.partialorder %v795, 0.0004427343
        %v797 = vsel %vm796, %v794, %v791
        %v798 = vsel %vm785, %v780, %v797
        %800 = vrot.lane.b32.xlu0 %v780, 16
        %v801 = vpop.permute.xlu0 %800
        %v803 = vmul.f32 %v780, %v801
        %805 = vrot.lane.b32.xlu0 %v803, 48
        %v806 = vpop.permute.xlu0 %805
        %vm808 = vcmask 130048
        %v809 = vsel %vm808, %v806, 0.0
        %810 = vadd.xlane.f32.xlu0 %v809
        %v811 = vpop.xlane.xlu0 %810
        %v812 = vmul.f32 %v697, %v798
        %v813 = vmul.f32 %v812, %v811
        %v814 = vsub.f32 0.0, %v813
        %v815 = vmul.f32 %v814, 1.442695
        %v816 = vpow.pop %v815
        %v817 = vadd.f32 %v816, 1.0
        %v818 = vrcp.pop %v817
        %v819 = vmul.f32 1.0, %v818
        %v820 = vmul.f32 %v813, %v819
        %v821 = vsub.f32 0.0, %v564
        %v822 = vmul.f32 %v821, 1.442695
        %v823 = vpow.pop %v822
        %v824 = vadd.f32 %v823, 1.0
        %v825 = vrcp.pop %v824
        %v826 = vmul.f32 1.0, %v825
        %v827 = vmul.f32 %v564, %v826
        %829 = vrot.lane.b32.xlu0 %v827, 64
        %v830 = vpop.permute.xlu0 %829
        %v832 = vmul.f32 %v820, %v830
        %v833 = vpack.c.bf16 %v832, %v832
        %v834 = vld [vmem:[%s10] sm:$0xf]
        %v835 = vld [vmem:[%s10 + $0x4] sm:$0xf]
        %v836 = vld [vmem:[%s10 + $0x8] sm:$0xf]
        %v837 = vld [vmem:[%s10 + $0xc] sm:$0xf]
        %v838 = vld [vmem:[%s10 + $0x10] sm:$0xf]
        %v839 = vld [vmem:[%s10 + $0x14] sm:$0xf]
        %v840 = vld [vmem:[%s10 + $0x18] sm:$0xf]
        %v841 = vld [vmem:[%s10 + $0x1c] sm:$0xf]
        %v842 = vld [vmem:[%s11] sm:$0x1]
        %v844 = vlaneseq
        %v845 = vshrl.u32 %v844, 7
        %v846 = vsub.s32 0, %v845
        %v847 = vrot.slane %v842, %v846
        %v857 = vunpack.c.l.b16 %v834
        %v858 = vunpack.c.l.b16 %v835
        %v859 = vunpack.c.l.b16 %v836
        %v860 = vunpack.c.l.b16 %v837
        %v861 = vunpack.c.l.b16 %v838
        %v862 = vunpack.c.l.b16 %v839
        %v863 = vunpack.c.l.b16 %v840
        %v864 = vunpack.c.l.b16 %v841
        %v865 = vpack.c.b16 %v858, %v857
        %v866 = vpack.c.b16 %v860, %v859
        %v867 = vpack.c.b16 %v862, %v861
        %v868 = vpack.c.b16 %v864, %v863
        %v874 = vsel %vm658, %v833, 0
        %876 = vmatprep.subr.bf16.mxu0 0
        %877 = vmatpush1.bf16.msra.mxu0 0
        %878 = vmatprep.subr.bf16.mxu0 0
        %879 = vmatpush1.bf16.msra.mxu0 0
        %880 = vmatprep.subr.bf16.mxu0 0
        %881 = vmatpush1.bf16.msra.mxu0 0
        %882 = vmatprep.subr.bf16.mxu0 0
        %883 = vmatpush1.bf16.msra.mxu0 0
        %884 = vmatprep.subr.bf16.mxu0 0
        %885 = vmatpush1.bf16.msra.mxu0 %v868
        %886 = vmatprep.subr.bf16.mxu0 0
        %887 = vmatpush1.bf16.msra.mxu0 %v867
        %888 = vmatprep.subr.bf16.mxu0 0
        %889 = vmatpush1.bf16.msra.mxu0 %v866
        %890 = vmatprep.subr.bf16.mxu0 0
        %891 = vmatpush1.bf16.msra.mxu0 %v865
        %892 = vmatprep.subr.bf16.mxu0 0
        %893 = vmatpush2.bf16.msra.mxu0 0
        %894 = vmatprep.subr.bf16.mxu0 0
        %895 = vmatpush2.bf16.msra.mxu0 0
        %896 = vmatprep.subr.bf16.mxu0 0
        %897 = vmatpush2.bf16.msra.mxu0 0
        %898 = vmatprep.subr.bf16.mxu0 0
        %899 = vmatpush2.bf16.msra.mxu0 0
        %900 = vmatprep.subr.bf16.mxu0 0
        %901 = vmatpush2.bf16.msra.mxu0 0
        %902 = vmatprep.subr.bf16.mxu0 0
        %903 = vmatpush2.bf16.msra.mxu0 0
        %904 = vmatprep.subr.bf16.mxu0 0
        %905 = vmatpush2.bf16.msra.mxu0 0
        %906 = vmatprep.subr.bf16.mxu0 0
        %907 = vmatpush2.bf16.msra.mxu0 0
        %908 = vmatprep.mubr.bf16.mxu0 0
        %909 = vmatmul.mubr.bf16.gmra.mxu0 %v874
        %v910 = vpop.f32.mrf.mxu0
        %v911 = vadd.f32 %v847, %v910
        %v912 = vpop.f32.mrf.mxu0
        %v913 = vpop.f32.mrf.mxu0
        %v914 = vpop.f32.mrf.mxu0
        %915 = vdwg.mxu0
        %916 = vst.msk [vmem:[%s466] sm:$0xff] %vm470, %v911
        %s917 = sand.u32 %s296, 1
        %s918 = scalar_lea.sflag [#allocation4], %s917
        %s919 = sand.u32 %s296, 1
        %s920 = smul.addr %s919, 8
        %s921 = scalar_lea.vmem [#allocation10], %s920
        // Predicated region
        $region85: #{tpu_custom_call.1} parent=67 // pred_check
          %p922 = pneg %p306
        $region86: #{tpu_custom_call.1} parent=67 // pred_check_branch
          %924 = sbr.rel (%p922) target = $region88
        $region87: #{tpu_custom_call.1} parent=67 // pred_region
          %s926 = ssub.s32 128, 128
          %927 = vsyncadd %s918, %s926
          %s928 = smul.addr %s31, 128
          %s929 = scalar_lea.hbm %s12, %s928
          %s931 = sshll.u32 %s921, 4
          %s932 = int_to_ptr.vmem [resolvable:$true] %s931
          %934 = dma.vmem_to_hbm [thread:$0]  %s932, 128, %s929, %s918
        $region88: #{tpu_custom_call.1} parent=67 // pred_fallthru
          _
      $region68: #{tpu_custom_call.1} parent=5 // pred_fallthru
        _
      %p935 = scmp.le.s32.totalorder 2, %s26
      // Predicated region
      $region89: #{tpu_custom_call.1} parent=5 // pred_check
        %p936 = pneg %p935
      $region90: #{tpu_custom_call.1} parent=5 // pred_check_branch
        %938 = sbr.rel (%p936) target = $region92
      $region91: #{tpu_custom_call.1} parent=5 // pred_region
        %s939 = ssub.s32 %s26, 2
        // Predicated region
        $region93: #{tpu_custom_call.1} parent=91 // pred_check
          %p940 = pneg %p312
        $region94: #{tpu_custom_call.1} parent=91 // pred_check_branch
          %942 = sbr.rel (%p940) target = $region96
        $region95: #{tpu_custom_call.1} parent=91 // pred_region
          %s943 = sand.u32 %s297, 1
          %s944 = scalar_lea.sflag [#allocation4], %s943
          %s945 = sand.u32 %s297, 1
          %s946 = smul.addr %s945, 8
          %s947 = scalar_lea.vmem [#allocation10], %s946
          %948 = dma.done %s944, 128
        $region96: #{tpu_custom_call.1} parent=91 // pred_fallthru
          _
      $region92: #{tpu_custom_call.1} parent=5 // pred_fallthru
        _
    $region6: #{tpu_custom_call.1} parent=1 // loop_footer
      %s30 = sadd.s32 1, %s26
    $region7: #{tpu_custom_call.1} parent=1 // loop_footer_branch
      %25 = sbr.rel target = $region3
    $region8: #{tpu_custom_call.1} parent=1 // loop_exit
      _
    %949 = vsyncpa [#allocation3], 1
    %s950 = scalar_lea.sflag [#allocation3], 1
    %951 = vsyncpa %s950, 1
    %952 = vsyncpa [#allocation6], 1
    %953 = vsyncpa [#allocation9], 1
    %954 = vsyncpa [#allocation4], 1
    %s955 = scalar_lea.sflag [#allocation4], 1
    %956 = vsyncpa %s955, 1

</llo_original>
